<compile_context>
chip_gen: v5e
topology: v5e:2x2
jax: 0.10.0
libtpu: 0.0.40
codegen_flags: <defaults>
</compile_context>

<pallas_src>
import functools

import jax
import jax.numpy as jnp
from jax import lax
from jax.experimental import pallas as pl
from jax.experimental.pallas import tpu as pltpu

# ---- small shapes consistent with an LSTMCell wrapped by ZoneOutCell ----
B = 8          # batch
INPUT = 32     # cell input size
HIDDEN = 64    # cell hidden size  -> packed (h|c) output is exactly 128 lanes
T_STEPS = 4    # steps for the fused sequence variant
ZONEOUT = 0.1

_VMEM = pl.BlockSpec(memory_space=pltpu.MemorySpace.VMEM)


def _sigmoid(x):
    # Single EUP tanh per gate (no exp + VPU divide).
    return 0.5 * (jnp.tanh(0.5 * x) + 1.0)


def _cell_update(gates, c, hidden):
    """torch.nn.LSTMCell gate order: i, f, g, o."""
    i = _sigmoid(gates[:, 0 * hidden:1 * hidden])
    f = _sigmoid(gates[:, 1 * hidden:2 * hidden])
    g = jnp.tanh(gates[:, 2 * hidden:3 * hidden])
    o = _sigmoid(gates[:, 3 * hidden:4 * hidden])
    c_next = f * c + i * g
    h_next = o * jnp.tanh(c_next)
    return h_next, c_next


# --------------------------------------------------------------------------
# Single-step kernel (== ZoneOutCell.forward)
# --------------------------------------------------------------------------
def _zoneout_step_kernel(*refs, hidden, zoneout, training):
    if training:
        x_ref, h_ref, c_ref, wx_ref, wh_ref, b_ref, m_ref, hc_ref = refs
    else:
        x_ref, h_ref, c_ref, wx_ref, wh_ref, b_ref, hc_ref = refs

    x = x_ref[...]
    h = h_ref[...]
    c = c_ref[...]
    bsz = x.shape[0]
    b_row = jnp.broadcast_to(b_ref[...], (bsz, 4 * hidden))

    gates = (jnp.dot(x, wx_ref[...], preferred_element_type=jnp.float32)
             + jnp.dot(h, wh_ref[...], preferred_element_type=jnp.float32)
             + b_row)
    h_next, c_next = _cell_update(gates, c, hidden)

    if training:
        keep = m_ref[...] > 0.5                      # (B, 2H) keep-old mask
        h_new = jnp.where(keep[:, :hidden], h, h_next)
        c_new = jnp.where(keep[:, hidden:], c, c_next)
    else:
        zk = jnp.float32(zoneout)
        h_new = zk * h + (1.0 - zk) * h_next
        c_new = zk * c + (1.0 - zk) * c_next

    # lane-dense packed output (B, 2*hidden); unpacked in the wrapper
    hc_ref[...] = jnp.concatenate([h_new, c_new], axis=1)


@functools.partial(jax.jit, static_argnames=("zoneout", "training"))
def zoneout_cell_step(inputs, hidden, w_x, w_h, b_row, mask=None,
                      *, zoneout=ZONEOUT, training=True):
    """One ZoneOutCell step: (h_new, c_new) = ZoneOutCell(x, (h, c)).

    w_x = W_ih^T (I, 4H), w_h = W_hh^T (H, 4H), b_row = (b_ih + b_hh)[None, :].
    mask (training only): float {0,1}, shape (B, 2H); 1 -> keep previous state.
    """
    h0, c0 = hidden
    bsz, hdim = h0.shape
    kernel = functools.partial(_zoneout_step_kernel, hidden=hdim,
                               zoneout=zoneout, training=training)
    operands = [inputs, h0, c0, w_x, w_h, b_row]
    in_specs = [_VMEM] * 6
    if training:
        operands.append(mask)
        in_specs.append(_VMEM)
    hc = pl.pallas_call(
        kernel,
        out_shape=jax.ShapeDtypeStruct((bsz, 2 * hdim), jnp.float32),
        in_specs=in_specs,
        out_specs=_VMEM,
    )(*operands)
    return hc[:, :hdim], hc[:, hdim:]


# --------------------------------------------------------------------------
# Fused multi-step variant: the cell applied over a (T, B, I) sequence in a
# single pallas_call invocation.  Everything (sequence, weights, masks,
# output slab) is resident in VMEM; the recurrence is a lax.fori_loop with
# (h, c) carried as values — no per-step grid/pipeline overhead.
# --------------------------------------------------------------------------
def _zoneout_seq_kernel(*refs, hidden, zoneout, training):
    if training:
        x_ref, h0_ref, c0_ref, wx_ref, wh_ref, b_ref, m_ref, hc_ref = refs
    else:
        x_ref, h0_ref, c0_ref, wx_ref, wh_ref, b_ref, hc_ref = refs

    tsteps, bsz, _ = x_ref.shape

    # ---- hoisted loop-invariants ----
    wx = wx_ref[...]                                         # (I, 4H)
    wh = wh_ref[...]                                         # (H, 4H)
    b_row = jnp.broadcast_to(b_ref[...], (bsz, 4 * hidden))  # (B, 4H)
    zk = jnp.float32(zoneout)

    def body(t, carry):
        h, c = carry
        x_t = x_ref[t]                                       # (B, I)
        gates = (jnp.dot(x_t, wx, preferred_element_type=jnp.float32)
                 + jnp.dot(h, wh, preferred_element_type=jnp.float32)
                 + b_row)
        h_next, c_next = _cell_update(gates, c, hidden)
        if training:
            keep = m_ref[t] > 0.5                            # (B, 2H)
            h_new = jnp.where(keep[:, :hidden], h, h_next)
            c_new = jnp.where(keep[:, hidden:], c, c_next)
        else:
            h_new = zk * h + (1.0 - zk) * h_next
            c_new = zk * c + (1.0 - zk) * c_next
        hc_ref[t] = jnp.concatenate([h_new, c_new], axis=1)  # lane-dense store
        return (h_new, c_new)

    lax.fori_loop(0, tsteps, body, (h0_ref[...], c0_ref[...]))


@functools.partial(jax.jit, static_argnames=("zoneout", "training"))
def zoneout_cell_sequence(inputs_seq, hidden, w_x, w_h, b_row, mask_seq=None,
                          *, zoneout=ZONEOUT, training=True):
    """Applies the ZoneOut LSTM cell over every step of (T, B, input) inside a
    single pallas_call.  Returns (h_seq, c_seq), each of shape (T, B, hidden).
    mask_seq (training only): float {0,1}, shape (T, B, 2H)."""
    h0, c0 = hidden
    tsteps, bsz, _ = inputs_seq.shape
    hdim = h0.shape[1]
    kernel = functools.partial(_zoneout_seq_kernel, hidden=hdim,
                               zoneout=zoneout, training=training)
    operands = [inputs_seq, h0, c0, w_x, w_h, b_row]
    in_specs = [_VMEM] * 6
    if training:
        operands.append(mask_seq)
        in_specs.append(_VMEM)
    hc_seq = pl.pallas_call(
        kernel,
        out_shape=jax.ShapeDtypeStruct((tsteps, bsz, 2 * hdim), jnp.float32),
        in_specs=in_specs,
        out_specs=_VMEM,
    )(*operands)
    return hc_seq[..., :hdim], hc_seq[..., hdim:]


# --------------------------------------------------------------------------
# Pure-JAX reference (torch.nn.LSTMCell semantics) for correctness checks.
# --------------------------------------------------------------------------
def _ref_lstm_cell(x, h, c, w_ih, w_hh, b_ih, b_hh):
    hi = jax.lax.Precision.HIGHEST
    gates = (jnp.dot(x, w_ih.T, precision=hi) + b_ih
             + jnp.dot(h, w_hh.T, precision=hi) + b_hh)
    i, f, g, o = jnp.split(gates, 4, axis=1)
    i = jax.nn.sigmoid(i)
    f = jax.nn.sigmoid(f)
    g = jnp.tanh(g)
    o = jax.nn.sigmoid(o)
    c_next = f * c + i * g
    h_next = o * jnp.tanh(c_next)
    return h_next, c_next


if __name__ == "__main__":
    key = jax.random.PRNGKey(0)
    kx, ks, kh, kc, kw1, kw2, kb1, kb2, km1, km2 = jax.random.split(key, 10)

    bound = 1.0 / HIDDEN ** 0.5
    w_ih = jax.random.uniform(kw1, (4 * HIDDEN, INPUT), jnp.float32, -bound, bound)
    w_hh = jax.random.uniform(kw2, (4 * HIDDEN, HIDDEN), jnp.float32, -bound, bound)
    b_ih = jax.random.uniform(kb1, (4 * HIDDEN,), jnp.float32, -bound, bound)
    b_hh = jax.random.uniform(kb2, (4 * HIDDEN,), jnp.float32, -bound, bound)
    # one-time parameter prep: transposed weights + merged bias
    w_x = w_ih.T                                   # (INPUT, 4H)
    w_h = w_hh.T                                   # (HIDDEN, 4H)
    b_row = (b_ih + b_hh)[None, :]                 # (1, 4H)

    x = jax.random.normal(kx, (B, INPUT), jnp.float32)
    x_seq = jax.random.normal(ks, (T_STEPS, B, INPUT), jnp.float32)
    h0 = jax.random.normal(kh, (B, HIDDEN), jnp.float32)
    c0 = jax.random.normal(kc, (B, HIDDEN), jnp.float32)

    # zoneout keep-old masks ~ Bernoulli(ZONEOUT), drawn in the wrapper
    # (torch does h.new(...).bernoulli_(prob) -> mask*old + (1-mask)*new)
    mask_step = jax.random.bernoulli(km1, ZONEOUT, (B, 2 * HIDDEN)).astype(jnp.float32)
    mask_seq = jax.random.bernoulli(km2, ZONEOUT,
                                    (T_STEPS, B, 2 * HIDDEN)).astype(jnp.float32)

    # ---- single step, eval mode (deterministic): compare with pure-JAX ref ----
    h_ev, c_ev = zoneout_cell_step(x, (h0, c0), w_x, w_h, b_row,
                                   zoneout=ZONEOUT, training=False)
    jax.block_until_ready((h_ev, c_ev))
    h_n, c_n = _ref_lstm_cell(x, h0, c0, w_ih, w_hh, b_ih, b_hh)
    h_ref = ZONEOUT * h0 + (1.0 - ZONEOUT) * h_n
    c_ref = ZONEOUT * c0 + (1.0 - ZONEOUT) * c_n
    assert jnp.allclose(h_ev, h_ref, atol=5e-3, rtol=1e-3)
    assert jnp.allclose(c_ev, c_ref, atol=5e-3, rtol=1e-3)

    # ---- single step, training mode: exact comparison with the masked blend ----
    h_tr, c_tr = zoneout_cell_step(x, (h0, c0), w_x, w_h, b_row, mask_step,
                                   zoneout=ZONEOUT, training=True)
    jax.block_until_ready((h_tr, c_tr))
    mh, mc = mask_step[:, :HIDDEN], mask_step[:, HIDDEN:]
    h_tref = mh * h0 + (1.0 - mh) * h_n
    c_tref = mc * c0 + (1.0 - mc) * c_n
    assert jnp.allclose(h_tr, h_tref, atol=5e-3, rtol=1e-3)
    assert jnp.allclose(c_tr, c_tref, atol=5e-3, rtol=1e-3)

    # ---- fused multi-step variant, eval mode: compare with recursive ref ----
    hs, cs = zoneout_cell_sequence(x_seq, (h0, c0), w_x, w_h, b_row,
                                   zoneout=ZONEOUT, training=False)
    jax.block_until_ready((hs, cs))
    h_r, c_r = h0, c0
    for t in range(T_STEPS):
        hn, cn = _ref_lstm_cell(x_seq[t], h_r, c_r, w_ih, w_hh, b_ih, b_hh)
        h_r = ZONEOUT * h_r + (1.0 - ZONEOUT) * hn
        c_r = ZONEOUT * c_r + (1.0 - ZONEOUT) * cn
        assert jnp.allclose(hs[t], h_r, atol=5e-3, rtol=1e-3)
        assert jnp.allclose(cs[t], c_r, atol=5e-3, rtol=1e-3)

    # ---- fused multi-step variant, training mode: exact masked recursion ----
    hs_tr, cs_tr = zoneout_cell_sequence(x_seq, (h0, c0), w_x, w_h, b_row,
                                         mask_seq, zoneout=ZONEOUT, training=True)
    jax.block_until_ready((hs_tr, cs_tr))
    h_r, c_r = h0, c0
    for t in range(T_STEPS):
        hn, cn = _ref_lstm_cell(x_seq[t], h_r, c_r, w_ih, w_hh, b_ih, b_hh)
        mh, mc = mask_seq[t, :, :HIDDEN], mask_seq[t, :, HIDDEN:]
        h_r = mh * h_r + (1.0 - mh) * hn
        c_r = mc * c_r + (1.0 - mc) * cn
        assert jnp.allclose(hs_tr[t], h_r, atol=5e-3, rtol=1e-3)
        assert jnp.allclose(cs_tr[t], c_r, atol=5e-3, rtol=1e-3)
    assert bool(jnp.all(jnp.isfinite(hs_tr))) and bool(jnp.all(jnp.isfinite(cs_tr)))

    print("KERNEL_OK")
</pallas_src>

<mosaic_0001>
module attributes {stable_mosaic.version = 11 : i64} {
  func.func @_zoneout_step_kernel(%arg0: memref<8x32xf32, #tpu.memory_space<vmem>>, %arg1: memref<8x64xf32, #tpu.memory_space<vmem>>, %arg2: memref<8x64xf32, #tpu.memory_space<vmem>>, %arg3: memref<32x256xf32, #tpu.memory_space<vmem>>, %arg4: memref<64x256xf32, #tpu.memory_space<vmem>>, %arg5: memref<1x256xf32, #tpu.memory_space<vmem>>, %arg6: memref<8x128xf32, #tpu.memory_space<vmem>>) attributes {dimension_semantics = [], scalar_prefetch = 0 : i64, scratch_operands = 0 : i64, tpu.core_type = #tpu.core_type<tc>} {
    %c0 = arith.constant 0 : index
    %c0_0 = arith.constant 0 : index
    %0 = vector.load %arg0[%c0, %c0_0] : memref<8x32xf32, #tpu.memory_space<vmem>>, vector<8x32xf32>
    %c0_1 = arith.constant 0 : index
    %c0_2 = arith.constant 0 : index
    %1 = vector.load %arg1[%c0_1, %c0_2] : memref<8x64xf32, #tpu.memory_space<vmem>>, vector<8x64xf32>
    %c0_3 = arith.constant 0 : index
    %c0_4 = arith.constant 0 : index
    %2 = vector.load %arg2[%c0_3, %c0_4] : memref<8x64xf32, #tpu.memory_space<vmem>>, vector<8x64xf32>
    %c0_5 = arith.constant 0 : index
    %c0_6 = arith.constant 0 : index
    %3 = vector.load %arg5[%c0_5, %c0_6] : memref<1x256xf32, #tpu.memory_space<vmem>>, vector<1x256xf32>
    %4 = vector.shape_cast %3 : vector<1x256xf32> to vector<1x256xf32>
    %5 = vector.broadcast %4 : vector<1x256xf32> to vector<8x256xf32>
    %c0_7 = arith.constant 0 : index
    %c0_8 = arith.constant 0 : index
    %6 = vector.load %arg3[%c0_7, %c0_8] : memref<32x256xf32, #tpu.memory_space<vmem>>, vector<32x256xf32>
    %cst = arith.constant dense<0.000000e+00> : vector<8x256xf32>
    %7 = tpu.matmul %0, %6, %cst {dimension_numbers = #tpu.dot_dimension_numbers<[1], [0], [0], [1], [0, 0, 1, 1], [], []>} : vector<8x32xf32>, vector<32x256xf32>, vector<8x256xf32> -> vector<8x256xf32>
    %c0_9 = arith.constant 0 : index
    %c0_10 = arith.constant 0 : index
    %8 = vector.load %arg4[%c0_9, %c0_10] : memref<64x256xf32, #tpu.memory_space<vmem>>, vector<64x256xf32>
    %cst_11 = arith.constant dense<0.000000e+00> : vector<8x256xf32>
    %9 = tpu.matmul %1, %8, %cst_11 {dimension_numbers = #tpu.dot_dimension_numbers<[1], [0], [0], [1], [0, 0, 1, 1], [], []>} : vector<8x64xf32>, vector<64x256xf32>, vector<8x256xf32> -> vector<8x256xf32>
    %10 = arith.addf %7, %9 : vector<8x256xf32>
    %11 = arith.addf %10, %5 : vector<8x256xf32>
    %12 = vector.extract_strided_slice %11 {offsets = [0, 0], sizes = [8, 64], strides = [1, 1]} : vector<8x256xf32> to vector<8x64xf32>
    %cst_12 = arith.constant 5.000000e-01 : f32
    %13 = vector.broadcast %cst_12 : f32 to vector<8x64xf32>
    %14 = arith.mulf %13, %12 : vector<8x64xf32>
    %15 = math.tanh %14 : vector<8x64xf32>
    %cst_13 = arith.constant 1.000000e+00 : f32
    %16 = vector.broadcast %cst_13 : f32 to vector<8x64xf32>
    %17 = arith.addf %15, %16 : vector<8x64xf32>
    %cst_14 = arith.constant 5.000000e-01 : f32
    %18 = vector.broadcast %cst_14 : f32 to vector<8x64xf32>
    %19 = arith.mulf %18, %17 : vector<8x64xf32>
    %20 = vector.extract_strided_slice %11 {offsets = [0, 64], sizes = [8, 64], strides = [1, 1]} : vector<8x256xf32> to vector<8x64xf32>
    %cst_15 = arith.constant 5.000000e-01 : f32
    %21 = vector.broadcast %cst_15 : f32 to vector<8x64xf32>
    %22 = arith.mulf %21, %20 : vector<8x64xf32>
    %23 = math.tanh %22 : vector<8x64xf32>
    %cst_16 = arith.constant 1.000000e+00 : f32
    %24 = vector.broadcast %cst_16 : f32 to vector<8x64xf32>
    %25 = arith.addf %23, %24 : vector<8x64xf32>
    %cst_17 = arith.constant 5.000000e-01 : f32
    %26 = vector.broadcast %cst_17 : f32 to vector<8x64xf32>
    %27 = arith.mulf %26, %25 : vector<8x64xf32>
    %28 = vector.extract_strided_slice %11 {offsets = [0, 128], sizes = [8, 64], strides = [1, 1]} : vector<8x256xf32> to vector<8x64xf32>
    %29 = math.tanh %28 : vector<8x64xf32>
    %30 = vector.extract_strided_slice %11 {offsets = [0, 192], sizes = [8, 64], strides = [1, 1]} : vector<8x256xf32> to vector<8x64xf32>
    %cst_18 = arith.constant 5.000000e-01 : f32
    %31 = vector.broadcast %cst_18 : f32 to vector<8x64xf32>
    %32 = arith.mulf %31, %30 : vector<8x64xf32>
    %33 = math.tanh %32 : vector<8x64xf32>
    %cst_19 = arith.constant 1.000000e+00 : f32
    %34 = vector.broadcast %cst_19 : f32 to vector<8x64xf32>
    %35 = arith.addf %33, %34 : vector<8x64xf32>
    %cst_20 = arith.constant 5.000000e-01 : f32
    %36 = vector.broadcast %cst_20 : f32 to vector<8x64xf32>
    %37 = arith.mulf %36, %35 : vector<8x64xf32>
    %38 = arith.mulf %27, %2 : vector<8x64xf32>
    %39 = arith.mulf %19, %29 : vector<8x64xf32>
    %40 = arith.addf %38, %39 : vector<8x64xf32>
    %41 = math.tanh %40 : vector<8x64xf32>
    %42 = arith.mulf %37, %41 : vector<8x64xf32>
    %cst_21 = arith.constant 1.000000e-01 : f32
    %43 = vector.broadcast %cst_21 : f32 to vector<8x64xf32>
    %44 = arith.mulf %43, %1 : vector<8x64xf32>
    %cst_22 = arith.constant 1.000000e+00 : f32
    %cst_23 = arith.constant 1.000000e-01 : f32
    %45 = arith.subf %cst_22, %cst_23 : f32
    %46 = vector.broadcast %45 : f32 to vector<8x64xf32>
    %47 = arith.mulf %46, %42 : vector<8x64xf32>
    %48 = arith.addf %44, %47 : vector<8x64xf32>
    %cst_24 = arith.constant 1.000000e-01 : f32
    %49 = vector.broadcast %cst_24 : f32 to vector<8x64xf32>
    %50 = arith.mulf %49, %2 : vector<8x64xf32>
    %cst_25 = arith.constant 1.000000e+00 : f32
    %cst_26 = arith.constant 1.000000e-01 : f32
    %51 = arith.subf %cst_25, %cst_26 : f32
    %52 = vector.broadcast %51 : f32 to vector<8x64xf32>
    %53 = arith.mulf %52, %40 : vector<8x64xf32>
    %54 = arith.addf %50, %53 : vector<8x64xf32>
    %55 = tpu.concatenate %48, %54 in 1 : vector<8x64xf32>, vector<8x64xf32> -> vector<8x128xf32>
    %c0_27 = arith.constant 0 : index
    %c0_28 = arith.constant 0 : index
    %56 = vector.load %arg6[%c0_27, %c0_28] : memref<8x128xf32, #tpu.memory_space<vmem>>, vector<8x128xf32>
    tpu.vector_store %arg6[%c0_27, %c0_28], %55 {strides = array<i32>} : memref<8x128xf32, #tpu.memory_space<vmem>>, vector<8x128xf32>,
    return
  }
}

</mosaic_0001>

<llo_original>
// kernel: zoneout_cell_step.1
$region0: #{zoneout_cell_step.1}
  #allocation0 [shape = 'u32[]', space=smem, size = 0x4, offset = 0x4, fixed_abs, tag = 'smem constant byte address 0x4 - core index']
  #allocation1 [shape = 'u32[72,128]{1,0:T(1,128)}', space=vmem, size = 0x9000, scoped, tag = 'internal scratch']
  %s0 = inlined_call_operand.hbm [shape: f32[8,32], index: 0, kind: input, shape index: {}]
  %s1 = inlined_call_operand.hbm [shape: f32[8,64], index: 1, kind: input, shape index: {}]
  %s2 = inlined_call_operand.hbm [shape: f32[8,64], index: 2, kind: input, shape index: {}]
  %s3 = inlined_call_operand.hbm [shape: f32[32,256], index: 3, kind: input, shape index: {}]
  %s4 = inlined_call_operand.hbm [shape: f32[64,256], index: 4, kind: input, shape index: {}]
  %s5 = inlined_call_operand.vmem [shape: f32[1,256], index: 5, kind: input, shape index: {}]
  %s6 = inlined_call_operand.vmem [shape: f32[8,128], index: 6, kind: output, shape index: {}]
  %s7 = sld [smem:[#allocation0]]
  $region54: #{zoneout_cell_step.1} parent=0
    _
  %s9 = ssub.s32 1, %s7
  %s10 = scalar_select 0, %s9, %s7
  $region1: #{zoneout_cell_step.1} parent=0
    #allocation2 [shape = 'u8[4096]{0}', space=vmem, size = 0x1000, scoped, tag = 'input window, operand 0, single buffered']
    #allocation3 [shape = 's32[1]{0}', space=sflag, size = 0x4, scoped, tag = 'scoped memory for zoneout_cell_step.1']
    #allocation4 [shape = 'u8[4096]{0}', space=vmem, size = 0x1000, scoped, tag = 'input window, operand 1, single buffered']
    #allocation5 [shape = 's32[1]{0}', space=sflag, size = 0x4, scoped, tag = 'scoped memory for zoneout_cell_step.1']
    #allocation6 [shape = 'u8[4096]{0}', space=vmem, size = 0x1000, scoped, tag = 'input window, operand 2, single buffered']
    #allocation7 [shape = 'u8[32768]{0}', space=vmem, size = 0x8000, scoped, tag = 'input window, operand 3, single buffered']
    #allocation8 [shape = 's32[1]{0}', space=sflag, size = 0x4, scoped, tag = 'scoped memory for zoneout_cell_step.1']
    #allocation9 [shape = 'u8[65536]{0}', space=vmem, size = 0x10000, scoped, tag = 'input window, operand 4, single buffered']
    %11 = vsyncpa [#allocation3], 0
    %12 = vsyncpa [#allocation5], 0
    %13 = vsyncpa [#allocation8], 0
    // Predicated region
    $region2: #{zoneout_cell_step.1} parent=1 // pred_check
      _
    $region3: #{zoneout_cell_step.1} parent=1 // pred_check_branch
      %15 = sbr.rel (0) target = $region5
    $region4: #{zoneout_cell_step.1} parent=1 // pred_region
      %17 = vsyncadd [#allocation3], 0
      %s19 = sshll.u32 %s0, 4
      %s20 = int_to_ptr.hbm [resolvable:$true] %s19
      %s21 = sshll.u32 [#allocation2], 4
      %s22 = int_to_ptr.vmem [resolvable:$true] %s21
      %24 = dma.hbm_to_vmem [thread:$0]  %s20, 128, %s22, [#allocation3]
    $region5: #{zoneout_cell_step.1} parent=1 // pred_fallthru
      _
    // Predicated region
    $region6: #{zoneout_cell_step.1} parent=1 // pred_check
      _
    $region7: #{zoneout_cell_step.1} parent=1 // pred_check_branch
      %26 = sbr.rel (0) target = $region9
    $region8: #{zoneout_cell_step.1} parent=1 // pred_region
      %28 = vsyncadd [#allocation5], 0
      %s30 = sshll.u32 %s1, 4
      %s31 = int_to_ptr.hbm [resolvable:$true] %s30
      %s32 = sshll.u32 [#allocation4], 4
      %s33 = int_to_ptr.vmem [resolvable:$true] %s32
      %35 = dma.hbm_to_vmem [thread:$0]  %s31, 128, %s33, [#allocation5]
    $region9: #{zoneout_cell_step.1} parent=1 // pred_fallthru
      _
    // Predicated region
    $region10: #{zoneout_cell_step.1} parent=1 // pred_check
      _
    $region11: #{zoneout_cell_step.1} parent=1 // pred_check_branch
      %37 = sbr.rel (0) target = $region13
    $region12: #{zoneout_cell_step.1} parent=1 // pred_region
      %39 = vsyncadd [#allocation5], 0
      %s41 = sshll.u32 %s2, 4
      %s42 = int_to_ptr.hbm [resolvable:$true] %s41
      %s43 = sshll.u32 [#allocation6], 4
      %s44 = int_to_ptr.vmem [resolvable:$true] %s43
      %46 = dma.hbm_to_vmem [thread:$0]  %s42, 128, %s44, [#allocation5]
    $region13: #{zoneout_cell_step.1} parent=1 // pred_fallthru
      _
    // Predicated region
    $region14: #{zoneout_cell_step.1} parent=1 // pred_check
      _
    $region15: #{zoneout_cell_step.1} parent=1 // pred_check_branch
      %48 = sbr.rel (0) target = $region17
    $region16: #{zoneout_cell_step.1} parent=1 // pred_region
      %50 = vsyncadd [#allocation8], 0
      %s51 = sshll.u32 %s3, 4
      %s52 = int_to_ptr.hbm [resolvable:$true] %s51
      %s53 = sshll.u32 [#allocation7], 4
      %s54 = int_to_ptr.vmem [resolvable:$true] %s53
      %59 = dma.hbm_to_vmem [thread:$0]  %s52, 1024, %s54, [#allocation8], 256, 256, 16
    $region17: #{zoneout_cell_step.1} parent=1 // pred_fallthru
      _
    // Predicated region
    $region18: #{zoneout_cell_step.1} parent=1 // pred_check
      _
    $region19: #{zoneout_cell_step.1} parent=1 // pred_check_branch
      %61 = sbr.rel (0) target = $region21
    $region20: #{zoneout_cell_step.1} parent=1 // pred_region
      %63 = vsyncadd [#allocation8], 0
      %s64 = sshll.u32 %s4, 4
      %s65 = int_to_ptr.hbm [resolvable:$true] %s64
      %s66 = sshll.u32 [#allocation9], 4
      %s67 = int_to_ptr.vmem [resolvable:$true] %s66
      %72 = dma.hbm_to_vmem [thread:$0]  %s65, 2048, %s67, [#allocation8], 256, 256, 16
    $region21: #{zoneout_cell_step.1} parent=1 // pred_fallthru
      _
    // Predicated region
    $region22: #{zoneout_cell_step.1} parent=1 // pred_check
      _
    $region23: #{zoneout_cell_step.1} parent=1 // pred_check_branch
      %74 = sbr.rel (0) target = $region25
    $region24: #{zoneout_cell_step.1} parent=1 // pred_region
      _
    $region25: #{zoneout_cell_step.1} parent=1 // pred_fallthru
      _
    // Predicated region
    $region26: #{zoneout_cell_step.1} parent=1 // pred_check
      _
    $region27: #{zoneout_cell_step.1} parent=1 // pred_check_branch
      %76 = sbr.rel (0) target = $region29
    $region28: #{zoneout_cell_step.1} parent=1 // pred_region
      %78 = dma.done [#allocation3], 128
    $region29: #{zoneout_cell_step.1} parent=1 // pred_fallthru
      _
    // Predicated region
    $region30: #{zoneout_cell_step.1} parent=1 // pred_check
      _
    $region31: #{zoneout_cell_step.1} parent=1 // pred_check_branch
      %80 = sbr.rel (0) target = $region33
    $region32: #{zoneout_cell_step.1} parent=1 // pred_region
      %82 = dma.done [#allocation5], 128
    $region33: #{zoneout_cell_step.1} parent=1 // pred_fallthru
      _
    // Predicated region
    $region34: #{zoneout_cell_step.1} parent=1 // pred_check
      _
    $region35: #{zoneout_cell_step.1} parent=1 // pred_check_branch
      %84 = sbr.rel (0) target = $region37
    $region36: #{zoneout_cell_step.1} parent=1 // pred_region
      %86 = dma.done [#allocation5], 128
    $region37: #{zoneout_cell_step.1} parent=1 // pred_fallthru
      _
    // Predicated region
    $region38: #{zoneout_cell_step.1} parent=1 // pred_check
      _
    $region39: #{zoneout_cell_step.1} parent=1 // pred_check_branch
      %88 = sbr.rel (0) target = $region41
    $region40: #{zoneout_cell_step.1} parent=1 // pred_region
      %90 = dma.done [#allocation8], 1024
    $region41: #{zoneout_cell_step.1} parent=1 // pred_fallthru
      _
    // Predicated region
    $region42: #{zoneout_cell_step.1} parent=1 // pred_check
      _
    $region43: #{zoneout_cell_step.1} parent=1 // pred_check_branch
      %92 = sbr.rel (0) target = $region45
    $region44: #{zoneout_cell_step.1} parent=1 // pred_region
      %94 = dma.done [#allocation8], 2048
    $region45: #{zoneout_cell_step.1} parent=1 // pred_fallthru
      _
    %v95 = vld [vmem:[#allocation2] sm:$0xff]
    %v96 = vld [vmem:[#allocation4] sm:$0xff]
    %v97 = vld [vmem:[#allocation6] sm:$0xff]
    %v98 = vld [vmem:[%s5] sm:$0x3]
    %v100 = vperm.slane %v98, 0
    %v101 = vperm.slane %v98, 1
    %v104 = vld [vmem:[#allocation7] sm:$0xff]
    %v105 = vld [vmem:[#allocation7 + $0x8] sm:$0xff]
    %v106 = vld [vmem:[#allocation7 + $0x10] sm:$0xff]
    %v107 = vld [vmem:[#allocation7 + $0x18] sm:$0xff]
    %v108 = vld [vmem:[#allocation7 + $0x20] sm:$0xff]
    %v109 = vld [vmem:[#allocation7 + $0x28] sm:$0xff]
    %v110 = vld [vmem:[#allocation7 + $0x30] sm:$0xff]
    %v111 = vld [vmem:[#allocation7 + $0x38] sm:$0xff]
    %v112 = vld [vmem:[#allocation9] sm:$0xff]
    %v113 = vld [vmem:[#allocation9 + $0x8] sm:$0xff]
    %v114 = vld [vmem:[#allocation9 + $0x10] sm:$0xff]
    %v115 = vld [vmem:[#allocation9 + $0x18] sm:$0xff]
    %v116 = vld [vmem:[#allocation9 + $0x20] sm:$0xff]
    %v117 = vld [vmem:[#allocation9 + $0x28] sm:$0xff]
    %v118 = vld [vmem:[#allocation9 + $0x30] sm:$0xff]
    %v119 = vld [vmem:[#allocation9 + $0x38] sm:$0xff]
    %v120 = vld [vmem:[#allocation9 + $0x40] sm:$0xff]
    %v121 = vld [vmem:[#allocation9 + $0x48] sm:$0xff]
    %v122 = vld [vmem:[#allocation9 + $0x50] sm:$0xff]
    %v123 = vld [vmem:[#allocation9 + $0x58] sm:$0xff]
    %v124 = vld [vmem:[#allocation9 + $0x60] sm:$0xff]
    %v125 = vld [vmem:[#allocation9 + $0x68] sm:$0xff]
    %v126 = vld [vmem:[#allocation9 + $0x70] sm:$0xff]
    %v127 = vld [vmem:[#allocation9 + $0x78] sm:$0xff]
    %vm128 = vcmask 523264
    %v130 = vsel %vm128, %v96, 0
    %132 = vmatpush.msra.mxu0 0.0
    %133 = vmatpush.msra.mxu0 0.0
    %134 = vmatpush.msra.mxu0 0.0
    %135 = vmatpush.msra.mxu0 0.0
    %136 = vmatpush.msra.mxu0 0.0
    %137 = vmatpush.msra.mxu0 0.0
    %138 = vmatpush.msra.mxu0 0.0
    %139 = vmatpush.msra.mxu0 0.0
    %140 = vmatpush.msra.mxu0 %v126
    %141 = vmatpush.msra.mxu0 %v124
    %142 = vmatpush.msra.mxu0 %v122
    %143 = vmatpush.msra.mxu0 %v120
    %144 = vmatpush.msra.mxu0 %v118
    %145 = vmatpush.msra.mxu0 %v116
    %146 = vmatpush.msra.mxu0 %v114
    %147 = vmatpush.msra.mxu0 %v112
    %148 = vmatmul.f32.gmra.mxu0 %v130
    %v149 = vpop.f32.mrf.mxu0
    %v150 = vadd.f32 0.0, %v149
    %151 = vdwg.mxu0
    %152 = vmatpush.msra.mxu0 0.0
    %153 = vmatpush.msra.mxu0 0.0
    %154 = vmatpush.msra.mxu0 0.0
    %155 = vmatpush.msra.mxu0 0.0
    %156 = vmatpush.msra.mxu0 0.0
    %157 = vmatpush.msra.mxu0 0.0
    %158 = vmatpush.msra.mxu0 0.0
    %159 = vmatpush.msra.mxu0 0.0
    %160 = vmatpush.msra.mxu0 %v127
    %161 = vmatpush.msra.mxu0 %v125
    %162 = vmatpush.msra.mxu0 %v123
    %163 = vmatpush.msra.mxu0 %v121
    %164 = vmatpush.msra.mxu0 %v119
    %165 = vmatpush.msra.mxu0 %v117
    %166 = vmatpush.msra.mxu0 %v115
    %167 = vmatpush.msra.mxu0 %v113
    %168 = vmatmul.f32.gmra.mxu0 %v130
    %v169 = vpop.f32.mrf.mxu0
    %v170 = vadd.f32 0.0, %v169
    %171 = vdwg.mxu0
    %vm172 = vcmask 261120
    %v174 = vsel %vm172, %v95, 0
    %176 = vmatpush.msra.mxu0 0.0
    %177 = vmatpush.msra.mxu0 0.0
    %178 = vmatpush.msra.mxu0 0.0
    %179 = vmatpush.msra.mxu0 0.0
    %180 = vmatpush.msra.mxu0 0.0
    %181 = vmatpush.msra.mxu0 0.0
    %182 = vmatpush.msra.mxu0 0.0
    %183 = vmatpush.msra.mxu0 0.0
    %184 = vmatpush.msra.mxu0 0.0
    %185 = vmatpush.msra.mxu0 0.0
    %186 = vmatpush.msra.mxu0 0.0
    %187 = vmatpush.msra.mxu0 0.0
    %188 = vmatpush.msra.mxu0 %v110
    %189 = vmatpush.msra.mxu0 %v108
    %190 = vmatpush.msra.mxu0 %v106
    %191 = vmatpush.msra.mxu0 %v104
    %192 = vmatmul.f32.gmra.mxu0 %v174
    %v193 = vpop.f32.mrf.mxu0
    %v194 = vadd.f32 %v150, %v193
    %195 = vdwg.mxu0
    %196 = vmatpush.msra.mxu0 0.0
    %197 = vmatpush.msra.mxu0 0.0
    %198 = vmatpush.msra.mxu0 0.0
    %199 = vmatpush.msra.mxu0 0.0
    %200 = vmatpush.msra.mxu0 0.0
    %201 = vmatpush.msra.mxu0 0.0
    %202 = vmatpush.msra.mxu0 0.0
    %203 = vmatpush.msra.mxu0 0.0
    %204 = vmatpush.msra.mxu0 0.0
    %205 = vmatpush.msra.mxu0 0.0
    %206 = vmatpush.msra.mxu0 0.0
    %207 = vmatpush.msra.mxu0 0.0
    %208 = vmatpush.msra.mxu0 %v111
    %209 = vmatpush.msra.mxu0 %v109
    %210 = vmatpush.msra.mxu0 %v107
    %211 = vmatpush.msra.mxu0 %v105
    %212 = vmatmul.f32.gmra.mxu0 %v174
    %v213 = vpop.f32.mrf.mxu0
    %v214 = vadd.f32 %v170, %v213
    %215 = vdwg.mxu0
    %v216 = vadd.f32 %v194, %v100
    %v217 = vadd.f32 %v214, %v101
    %v218 = vmul.f32 %v216, 0.5
    %v219 = vtanh.pop %v218
    %v220 = vadd.f32 %v219, 1.0
    %v221 = vmul.f32 %v220, 0.5
    %v222 = vtanh.pop %v217
    %v223 = vmul.f32 %v217, 0.5
    %v224 = vtanh.pop %v223
    %v225 = vadd.f32 %v224, 1.0
    %v226 = vmul.f32 %v225, 0.5
    %228 = vrot.lane.b32.xlu0 %v97, 64
    %v229 = vpop.permute.xlu0 %228
    %v231 = vmul.f32 %v221, %v229
    %v232 = vmul.f32 %v221, %v222
    %234 = vrot.lane.b32.xlu0 %v232, 64
    %v235 = vpop.permute.xlu0 %234
    %v237 = vadd.f32 %v231, %v235
    %v238 = vtanh.pop %v237
    %v239 = vmul.f32 %v226, %v238
    %v240 = vmul.f32 %v96, 0.1
    %v241 = vmul.f32 %v239, 0.9
    %243 = vrot.lane.b32.xlu0 %v241, 64
    %v244 = vpop.permute.xlu0 %243
    %v246 = vadd.f32 %v240, %v244
    %v247 = vmul.f32 %v97, 0.1
    %v248 = vmul.f32 %v237, 0.9
    %250 = vrot.lane.b32.xlu0 %v248, 64
    %v251 = vpop.permute.xlu0 %250
    %v253 = vadd.f32 %v247, %v251
    %255 = vrot.lane.b32.xlu0 %v253, 64
    %v256 = vpop.permute.xlu0 %255
    %v258 = vsel %vm128, %v246, %v256
    %259 = vst [vmem:[%s6] sm:$0xff] %v258
    // Predicated region
    $region46: #{zoneout_cell_step.1} parent=1 // pred_check
      _
    $region47: #{zoneout_cell_step.1} parent=1 // pred_check_branch
      %261 = sbr.rel (0) target = $region49
    $region48: #{zoneout_cell_step.1} parent=1 // pred_region
      _
    $region49: #{zoneout_cell_step.1} parent=1 // pred_fallthru
      _
    // Predicated region
    $region50: #{zoneout_cell_step.1} parent=1 // pred_check
      _
    $region51: #{zoneout_cell_step.1} parent=1 // pred_check_branch
      %263 = sbr.rel (0) target = $region53
    $region52: #{zoneout_cell_step.1} parent=1 // pred_region
      _
    $region53: #{zoneout_cell_step.1} parent=1 // pred_fallthru
      _
    %264 = vsyncpa [#allocation3], 1
    %265 = vsyncpa [#allocation5], 1
    %266 = vsyncpa [#allocation8], 1

</llo_original>
